<compile_context>
chip_gen: v7x
topology: tpu7x:2x2x1
jax: 0.10.0
libtpu: 0.0.40
codegen_flags: <defaults>
</compile_context>

<pallas_src>
import functools

import jax
import jax.numpy as jnp
import numpy as np
from jax import lax
from jax.experimental import pallas as pl
from jax.experimental.pallas import tpu as pltpu

LN_EPS = 1e-5


def _mha_kernel(x_ref, wqkv_ref, wo_ref, g_ref, b_ref, o_ref,
                ln_s, q_s, k_s, v_s, vec_s,
                *, n_head, d_head, q_tile):
    qi = pl.program_id(1)
    hd = n_head * d_head
    cdt = wqkv_ref.dtype                      # MXU operand dtype (bf16 by default)

    # ---- once per batch element: LayerNorm + fused QKV projection -----------
    @pl.when(qi == 0)
    def _():
        x = x_ref[0].astype(jnp.float32)                       # (N, D)
        mu = jnp.mean(x, axis=-1, keepdims=True)
        var = jnp.mean((x - mu) ** 2, axis=-1, keepdims=True)
        ln = (x - mu) * lax.rsqrt(var + LN_EPS)
        ln = ln * g_ref[0].astype(jnp.float32) + b_ref[0].astype(jnp.float32)
        ln_s[...] = ln                                          # residual source (f32)

        # Fused QKV: one (N, D) @ (D, 3*H*Dh) MXU pass, f32 accumulation.
        qkv = jnp.dot(ln.astype(cdt), wqkv_ref[...],
                      preferred_element_type=jnp.float32)       # (N, 3*H*Dh)

        # Cache Q/K/V head-major (H, N, Dh) so the per-tile attention matmuls
        # are lane-dense batched dot_generals.  These slices are 128-aligned
        # when d_head is a multiple of 128 and run only once per batch element.
        for h in range(n_head):
            q_s[h] = qkv[:, h * d_head:(h + 1) * d_head].astype(cdt)
            k_s[h] = qkv[:, hd + h * d_head:hd + (h + 1) * d_head].astype(cdt)
            v_s[h] = qkv[:, 2 * hd + h * d_head:2 * hd + (h + 1) * d_head].astype(cdt)

    # ---- per query tile: attention + single output projection ---------------
    q0 = pl.multiple_of(qi * q_tile, q_tile)
    qh = q_s[:, pl.ds(q0, q_tile), :]                           # (H, TQ, Dh)
    kh = k_s[...]                                               # (H, N, Dh)
    vh = v_s[...]                                               # (H, N, Dh)

    scale = 1.0 / (d_head ** 0.5)
    # Batched scores: contract the last dim directly (no kh.T / XLU transpose).
    s = jnp.einsum('hqd,hkd->hqk', qh, kh,
                   preferred_element_type=jnp.float32) * scale  # (H, TQ, N) f32
    m = jnp.max(s, axis=-1, keepdims=True)
    p = jnp.exp(s - m)
    p = p * pl.reciprocal(jnp.sum(p, axis=-1, keepdims=True), approx=True)

    vec = jnp.einsum('hqk,hkd->hqd', p.astype(cdt), vh,
                     preferred_element_type=jnp.float32)        # (H, TQ, Dh) f32

    # Pack heads back to (TQ, H*Dh) and do ONE output-projection matmul
    # (contraction K = H*Dh instead of H matmuls with K = Dh).
    for h in range(n_head):
        vec_s[:, h * d_head:(h + 1) * d_head] = vec[h].astype(cdt)
    attn_out = jnp.dot(vec_s[...], wo_ref[...],
                       preferred_element_type=jnp.float32)      # (TQ, D)

    resid = ln_s[pl.ds(q0, q_tile), :]                          # f32 residual
    o_ref[0] = (resid + attn_out).astype(o_ref.dtype)


def _pick_q_tile(n, target):
    """Largest query tile <= target that divides n (multiple of 8), else n."""
    if n <= target:
        return n
    best = None
    for cand in range(8, target + 1, 8):
        if n % cand == 0:
            best = cand
    return best if best is not None else n


def multi_head_attn(x, wq, wk, wv, wo, gamma, beta, *, n_head, d_head,
                    q_tile=256, compute_dtype=jnp.bfloat16):
    """x: (bsz, n, d_model); weights already (in_features, out_features)."""
    bsz, n, d_model = x.shape
    hd = n_head * d_head

    tq = _pick_q_tile(n, q_tile)
    num_q_tiles = n // tq

    # Fused QKV weight; MXU operands in bf16 (f32 accumulation in-kernel).
    wqkv = jnp.concatenate([wq, wk, wv], axis=1).astype(compute_dtype)
    wo_c = wo.astype(compute_dtype)
    gamma2 = gamma.reshape(1, d_model).astype(jnp.float32)
    beta2 = beta.reshape(1, d_model).astype(jnp.float32)

    kernel = functools.partial(_mha_kernel, n_head=n_head, d_head=d_head,
                               q_tile=tq)
    return pl.pallas_call(
        kernel,
        out_shape=jax.ShapeDtypeStruct((bsz, n, d_model), x.dtype),
        grid_spec=pltpu.PrefetchScalarGridSpec(
            num_scalar_prefetch=0,
            grid=(bsz, num_q_tiles),
            in_specs=[
                # Full sequence per batch element (K/V source); the index map is
                # constant across the q-tile axis, so it is DMA'd once per b.
                pl.BlockSpec((1, n, d_model), lambda b, q: (b, 0, 0)),   # x
                # Grid-invariant weights: fetched once for the whole grid.
                pl.BlockSpec((d_model, 3 * hd), lambda b, q: (0, 0)),    # Wqkv
                pl.BlockSpec((hd, d_model), lambda b, q: (0, 0)),        # Wo
                pl.BlockSpec((1, d_model), lambda b, q: (0, 0)),         # gamma
                pl.BlockSpec((1, d_model), lambda b, q: (0, 0)),         # beta
            ],
            out_specs=pl.BlockSpec((1, tq, d_model), lambda b, q: (b, q, 0)),
            scratch_shapes=[
                pltpu.VMEM((n, d_model), jnp.float32),            # ln (residual)
                pltpu.VMEM((n_head, n, d_head), compute_dtype),   # Q cache
                pltpu.VMEM((n_head, n, d_head), compute_dtype),   # K cache
                pltpu.VMEM((n_head, n, d_head), compute_dtype),   # V cache
                pltpu.VMEM((tq, hd), compute_dtype),              # packed attn_vec
            ]),
        compiler_params=pltpu.CompilerParams(
            dimension_semantics=("parallel", "arbitrary"),
            vmem_limit_bytes=48 * 1024 * 1024),
    )(x, wqkv, wo_c, gamma2, beta2)


def _reference(x, wq, wk, wv, wo, gamma, beta, *, n_head, d_head):
    """Plain-JAX mirror of the PyTorch forward (pre_lnorm, no mask, no dropout)."""
    mu = jnp.mean(x, -1, keepdims=True)
    var = jnp.mean((x - mu) ** 2, -1, keepdims=True)
    ln = (x - mu) / jnp.sqrt(var + LN_EPS) * gamma + beta
    b, n, _ = x.shape
    q = (ln @ wq).reshape(b, n, n_head, d_head)
    k = (ln @ wk).reshape(b, n, n_head, d_head)
    v = (ln @ wv).reshape(b, n, n_head, d_head)
    s = jnp.einsum('bind,bjnd->bnij', q, k) * (1.0 / d_head ** 0.5)
    p = jax.nn.softmax(s, axis=-1)
    vec = jnp.einsum('bnij,bjnd->bind', p, v).reshape(b, n, n_head * d_head)
    return ln + vec @ wo


if __name__ == "__main__":
    # Small shapes consistent with the module: bsz=2, seq=8, d_model=32,
    # n_head=4, d_head=8.
    bsz, n, d_model, n_head, d_head = 2, 8, 32, 4, 8
    hd = n_head * d_head

    key = jax.random.PRNGKey(0)
    kx, kq, kk, kv, ko = jax.random.split(key, 5)
    x = jax.random.normal(kx, (bsz, n, d_model), dtype=jnp.float32)
    # nn.Linear weight is (out, in); we keep them as (in, out) for x @ W.
    wq = jax.random.normal(kq, (d_model, hd), dtype=jnp.float32) * 0.05
    wk = jax.random.normal(kk, (d_model, hd), dtype=jnp.float32) * 0.05
    wv = jax.random.normal(kv, (d_model, hd), dtype=jnp.float32) * 0.05
    wo = jax.random.normal(ko, (hd, d_model), dtype=jnp.float32) * 0.05
    gamma = jnp.ones((d_model,), jnp.float32)
    beta = jnp.zeros((d_model,), jnp.float32)

    out = multi_head_attn(x, wq, wk, wv, wo, gamma, beta,
                          n_head=n_head, d_head=d_head)
    out = jax.block_until_ready(out)

    ref = _reference(x, wq, wk, wv, wo, gamma, beta,
                     n_head=n_head, d_head=d_head)
    # bf16 MXU operands with f32 accumulation -> relax tolerance accordingly.
    np.testing.assert_allclose(np.asarray(out), np.asarray(ref),
                               rtol=2e-2, atol=2e-2)
    print("KERNEL_OK")
</pallas_src>

<mosaic_0001>
module attributes {stable_mosaic.version = 11 : i64} {
  func.func @_mha_kernel(%arg0: i32, %arg1: i32, %arg2: memref<1x8x32xf32, #tpu.memory_space<vmem>>, %arg3: memref<32x96xbf16, #tpu.memory_space<vmem>>, %arg4: memref<32x32xbf16, #tpu.memory_space<vmem>>, %arg5: memref<1x32xf32, #tpu.memory_space<vmem>>, %arg6: memref<1x32xf32, #tpu.memory_space<vmem>>, %arg7: memref<1x8x32xf32, #tpu.memory_space<vmem>>, %arg8: memref<8x32xf32, #tpu.memory_space<vmem>>, %arg9: memref<4x8x8xbf16, #tpu.memory_space<vmem>>, %arg10: memref<4x8x8xbf16, #tpu.memory_space<vmem>>, %arg11: memref<4x8x8xbf16, #tpu.memory_space<vmem>>, %arg12: memref<8x32xbf16, #tpu.memory_space<vmem>>) attributes {dimension_semantics = [#tpu.dimension_semantics<parallel>, #tpu.dimension_semantics<arbitrary>], iteration_bounds = array<i64: 2, 1>, scalar_prefetch = 0 : i64, scratch_operands = 5 : i64, tpu.core_type = #tpu.core_type<tc>, window_params = [{transform_indices = @transform_0, window_bounds = array<i64: 1, 8, 32>}, {pipeline_mode = #tpu.pipeline_mode<synchronous>, transform_indices = @transform_1, window_bounds = array<i64: 32, 96>}, {pipeline_mode = #tpu.pipeline_mode<synchronous>, transform_indices = @transform_2, window_bounds = array<i64: 32, 32>}, {pipeline_mode = #tpu.pipeline_mode<synchronous>, transform_indices = @transform_3, window_bounds = array<i64: 1, 32>}, {pipeline_mode = #tpu.pipeline_mode<synchronous>, transform_indices = @transform_4, window_bounds = array<i64: 1, 32>}, {transform_indices = @transform_5, window_bounds = array<i64: 1, 8, 32>}]} {
    %c0_i32 = arith.constant 0 : i32
    %0 = arith.cmpi eq, %arg1, %c0_i32 : i32
    %1 = arith.extui %0 : i1 to i32
    %c0_i32_0 = arith.constant 0 : i32
    %2 = arith.cmpi ne, %1, %c0_i32_0 : i32
    scf.if %2 {
      %c0_26 = arith.constant 0 : index
      %c0_27 = arith.constant 0 : index
      %c0_28 = arith.constant 0 : index
      %49 = vector.load %arg2[%c0_26, %c0_27, %c0_28] : memref<1x8x32xf32, #tpu.memory_space<vmem>>, vector<1x8x32xf32>
      %50 = vector.shape_cast %49 : vector<1x8x32xf32> to vector<8x32xf32>
      %cst_29 = arith.constant dense<0.000000e+00> : vector<8xf32>
      %51 = vector.multi_reduction <add>, %50, %cst_29 [1] : vector<8x32xf32> to vector<8xf32>
      %52 = vector.shape_cast %51 : vector<8xf32> to vector<8x1xf32>
      %cst_30 = arith.constant 3.200000e+01 : f32
      %53 = vector.broadcast %cst_30 : f32 to vector<8x1xf32>
      %54 = arith.divf %52, %53 : vector<8x1xf32>
      %55 = vector.broadcast %54 : vector<8x1xf32> to vector<8x32xf32>
      %56 = arith.subf %50, %55 : vector<8x32xf32>
      %57 = arith.mulf %56, %56 : vector<8x32xf32>
      %cst_31 = arith.constant dense<0.000000e+00> : vector<8xf32>
      %58 = vector.multi_reduction <add>, %57, %cst_31 [1] : vector<8x32xf32> to vector<8xf32>
      %59 = vector.shape_cast %58 : vector<8xf32> to vector<8x1xf32>
      %cst_32 = arith.constant 3.200000e+01 : f32
      %60 = vector.broadcast %cst_32 : f32 to vector<8x1xf32>
      %61 = arith.divf %59, %60 : vector<8x1xf32>
      %62 = vector.broadcast %54 : vector<8x1xf32> to vector<8x32xf32>
      %63 = arith.subf %50, %62 : vector<8x32xf32>
      %cst_33 = arith.constant 9.99999974E-6 : f32
      %64 = vector.broadcast %cst_33 : f32 to vector<8x1xf32>
      %65 = arith.addf %61, %64 : vector<8x1xf32>
      %66 = math.rsqrt %65 : vector<8x1xf32>
      %67 = vector.broadcast %66 : vector<8x1xf32> to vector<8x32xf32>
      %68 = arith.mulf %63, %67 : vector<8x32xf32>
      %c0_34 = arith.constant 0 : index
      %c0_35 = arith.constant 0 : index
      %69 = vector.load %arg5[%c0_34, %c0_35] : memref<1x32xf32, #tpu.memory_space<vmem>>, vector<1x32xf32>
      %70 = vector.shape_cast %69 : vector<1x32xf32> to vector<32xf32>
      %71 = vector.shape_cast %70 : vector<32xf32> to vector<1x32xf32>
      %72 = vector.broadcast %71 : vector<1x32xf32> to vector<8x32xf32>
      %73 = arith.mulf %68, %72 : vector<8x32xf32>
      %c0_36 = arith.constant 0 : index
      %c0_37 = arith.constant 0 : index
      %74 = vector.load %arg6[%c0_36, %c0_37] : memref<1x32xf32, #tpu.memory_space<vmem>>, vector<1x32xf32>
      %75 = vector.shape_cast %74 : vector<1x32xf32> to vector<32xf32>
      %76 = vector.shape_cast %75 : vector<32xf32> to vector<1x32xf32>
      %77 = vector.broadcast %76 : vector<1x32xf32> to vector<8x32xf32>
      %78 = arith.addf %73, %77 : vector<8x32xf32>
      %c0_38 = arith.constant 0 : index
      %c0_39 = arith.constant 0 : index
      %79 = vector.load %arg8[%c0_38, %c0_39] : memref<8x32xf32, #tpu.memory_space<vmem>>, vector<8x32xf32>
      tpu.vector_store %arg8[%c0_38, %c0_39], %78 {strides = array<i32>} : memref<8x32xf32, #tpu.memory_space<vmem>>, vector<8x32xf32>,
      %80 = arith.truncf %78 : vector<8x32xf32> to vector<8x32xbf16>
      %c0_40 = arith.constant 0 : index
      %c0_41 = arith.constant 0 : index
      %81 = vector.load %arg3[%c0_40, %c0_41] : memref<32x96xbf16, #tpu.memory_space<vmem>>, vector<32x96xbf16>
      %cst_42 = arith.constant dense<0.000000e+00> : vector<8x96xf32>
      %82 = tpu.matmul %80, %81, %cst_42 {dimension_numbers = #tpu.dot_dimension_numbers<[1], [0], [0], [1], [0, 0, 1, 1], [], []>} : vector<8x32xbf16>, vector<32x96xbf16>, vector<8x96xf32> -> vector<8x96xf32>
      %83 = vector.extract_strided_slice %82 {offsets = [0, 0], sizes = [8, 8], strides = [1, 1]} : vector<8x96xf32> to vector<8x8xf32>
      %84 = arith.truncf %83 : vector<8x8xf32> to vector<8x8xbf16>
      %c0_43 = arith.constant 0 : index
      %c0_44 = arith.constant 0 : index
      %c0_45 = arith.constant 0 : index
      %85 = vector.load %arg9[%c0_43, %c0_44, %c0_45] : memref<4x8x8xbf16, #tpu.memory_space<vmem>>, vector<1x8x8xbf16>
      %86 = vector.shape_cast %85 : vector<1x8x8xbf16> to vector<8x8xbf16>
      %87 = vector.shape_cast %84 : vector<8x8xbf16> to vector<1x8x8xbf16>
      tpu.vector_store %arg9[%c0_43, %c0_44, %c0_45], %87 {strides = array<i32>} : memref<4x8x8xbf16, #tpu.memory_space<vmem>>, vector<1x8x8xbf16>,
      %88 = vector.extract_strided_slice %82 {offsets = [0, 32], sizes = [8, 8], strides = [1, 1]} : vector<8x96xf32> to vector<8x8xf32>
      %89 = arith.truncf %88 : vector<8x8xf32> to vector<8x8xbf16>
      %c0_46 = arith.constant 0 : index
      %c0_47 = arith.constant 0 : index
      %c0_48 = arith.constant 0 : index
      %90 = vector.load %arg10[%c0_46, %c0_47, %c0_48] : memref<4x8x8xbf16, #tpu.memory_space<vmem>>, vector<1x8x8xbf16>
      %91 = vector.shape_cast %90 : vector<1x8x8xbf16> to vector<8x8xbf16>
      %92 = vector.shape_cast %89 : vector<8x8xbf16> to vector<1x8x8xbf16>
      tpu.vector_store %arg10[%c0_46, %c0_47, %c0_48], %92 {strides = array<i32>} : memref<4x8x8xbf16, #tpu.memory_space<vmem>>, vector<1x8x8xbf16>,
      %93 = vector.extract_strided_slice %82 {offsets = [0, 64], sizes = [8, 8], strides = [1, 1]} : vector<8x96xf32> to vector<8x8xf32>
      %94 = arith.truncf %93 : vector<8x8xf32> to vector<8x8xbf16>
      %c0_49 = arith.constant 0 : index
      %c0_50 = arith.constant 0 : index
      %c0_51 = arith.constant 0 : index
      %95 = vector.load %arg11[%c0_49, %c0_50, %c0_51] : memref<4x8x8xbf16, #tpu.memory_space<vmem>>, vector<1x8x8xbf16>
      %96 = vector.shape_cast %95 : vector<1x8x8xbf16> to vector<8x8xbf16>
      %97 = vector.shape_cast %94 : vector<8x8xbf16> to vector<1x8x8xbf16>
      tpu.vector_store %arg11[%c0_49, %c0_50, %c0_51], %97 {strides = array<i32>} : memref<4x8x8xbf16, #tpu.memory_space<vmem>>, vector<1x8x8xbf16>,
      %98 = vector.extract_strided_slice %82 {offsets = [0, 8], sizes = [8, 8], strides = [1, 1]} : vector<8x96xf32> to vector<8x8xf32>
      %99 = arith.truncf %98 : vector<8x8xf32> to vector<8x8xbf16>
      %c1 = arith.constant 1 : index
      %c0_52 = arith.constant 0 : index
      %c0_53 = arith.constant 0 : index
      %100 = vector.load %arg9[%c1, %c0_52, %c0_53] : memref<4x8x8xbf16, #tpu.memory_space<vmem>>, vector<1x8x8xbf16>
      %101 = vector.shape_cast %100 : vector<1x8x8xbf16> to vector<8x8xbf16>
      %102 = vector.shape_cast %99 : vector<8x8xbf16> to vector<1x8x8xbf16>
      tpu.vector_store %arg9[%c1, %c0_52, %c0_53], %102 {strides = array<i32>} : memref<4x8x8xbf16, #tpu.memory_space<vmem>>, vector<1x8x8xbf16>,
      %103 = vector.extract_strided_slice %82 {offsets = [0, 40], sizes = [8, 8], strides = [1, 1]} : vector<8x96xf32> to vector<8x8xf32>
      %104 = arith.truncf %103 : vector<8x8xf32> to vector<8x8xbf16>
      %c1_54 = arith.constant 1 : index
      %c0_55 = arith.constant 0 : index
      %c0_56 = arith.constant 0 : index
      %105 = vector.load %arg10[%c1_54, %c0_55, %c0_56] : memref<4x8x8xbf16, #tpu.memory_space<vmem>>, vector<1x8x8xbf16>
      %106 = vector.shape_cast %105 : vector<1x8x8xbf16> to vector<8x8xbf16>
      %107 = vector.shape_cast %104 : vector<8x8xbf16> to vector<1x8x8xbf16>
      tpu.vector_store %arg10[%c1_54, %c0_55, %c0_56], %107 {strides = array<i32>} : memref<4x8x8xbf16, #tpu.memory_space<vmem>>, vector<1x8x8xbf16>,
      %108 = vector.extract_strided_slice %82 {offsets = [0, 72], sizes = [8, 8], strides = [1, 1]} : vector<8x96xf32> to vector<8x8xf32>
      %109 = arith.truncf %108 : vector<8x8xf32> to vector<8x8xbf16>
      %c1_57 = arith.constant 1 : index
      %c0_58 = arith.constant 0 : index
      %c0_59 = arith.constant 0 : index
      %110 = vector.load %arg11[%c1_57, %c0_58, %c0_59] : memref<4x8x8xbf16, #tpu.memory_space<vmem>>, vector<1x8x8xbf16>
      %111 = vector.shape_cast %110 : vector<1x8x8xbf16> to vector<8x8xbf16>
      %112 = vector.shape_cast %109 : vector<8x8xbf16> to vector<1x8x8xbf16>
      tpu.vector_store %arg11[%c1_57, %c0_58, %c0_59], %112 {strides = array<i32>} : memref<4x8x8xbf16, #tpu.memory_space<vmem>>, vector<1x8x8xbf16>,
      %113 = vector.extract_strided_slice %82 {offsets = [0, 16], sizes = [8, 8], strides = [1, 1]} : vector<8x96xf32> to vector<8x8xf32>
      %114 = arith.truncf %113 : vector<8x8xf32> to vector<8x8xbf16>
      %c2 = arith.constant 2 : index
      %c0_60 = arith.constant 0 : index
      %c0_61 = arith.constant 0 : index
      %115 = vector.load %arg9[%c2, %c0_60, %c0_61] : memref<4x8x8xbf16, #tpu.memory_space<vmem>>, vector<1x8x8xbf16>
      %116 = vector.shape_cast %115 : vector<1x8x8xbf16> to vector<8x8xbf16>
      %117 = vector.shape_cast %114 : vector<8x8xbf16> to vector<1x8x8xbf16>
      tpu.vector_store %arg9[%c2, %c0_60, %c0_61], %117 {strides = array<i32>} : memref<4x8x8xbf16, #tpu.memory_space<vmem>>, vector<1x8x8xbf16>,
      %118 = vector.extract_strided_slice %82 {offsets = [0, 48], sizes = [8, 8], strides = [1, 1]} : vector<8x96xf32> to vector<8x8xf32>
      %119 = arith.truncf %118 : vector<8x8xf32> to vector<8x8xbf16>
      %c2_62 = arith.constant 2 : index
      %c0_63 = arith.constant 0 : index
      %c0_64 = arith.constant 0 : index
      %120 = vector.load %arg10[%c2_62, %c0_63, %c0_64] : memref<4x8x8xbf16, #tpu.memory_space<vmem>>, vector<1x8x8xbf16>
      %121 = vector.shape_cast %120 : vector<1x8x8xbf16> to vector<8x8xbf16>
      %122 = vector.shape_cast %119 : vector<8x8xbf16> to vector<1x8x8xbf16>
      tpu.vector_store %arg10[%c2_62, %c0_63, %c0_64], %122 {strides = array<i32>} : memref<4x8x8xbf16, #tpu.memory_space<vmem>>, vector<1x8x8xbf16>,
      %123 = vector.extract_strided_slice %82 {offsets = [0, 80], sizes = [8, 8], strides = [1, 1]} : vector<8x96xf32> to vector<8x8xf32>
      %124 = arith.truncf %123 : vector<8x8xf32> to vector<8x8xbf16>
      %c2_65 = arith.constant 2 : index
      %c0_66 = arith.constant 0 : index
      %c0_67 = arith.constant 0 : index
      %125 = vector.load %arg11[%c2_65, %c0_66, %c0_67] : memref<4x8x8xbf16, #tpu.memory_space<vmem>>, vector<1x8x8xbf16>
      %126 = vector.shape_cast %125 : vector<1x8x8xbf16> to vector<8x8xbf16>
      %127 = vector.shape_cast %124 : vector<8x8xbf16> to vector<1x8x8xbf16>
      tpu.vector_store %arg11[%c2_65, %c0_66, %c0_67], %127 {strides = array<i32>} : memref<4x8x8xbf16, #tpu.memory_space<vmem>>, vector<1x8x8xbf16>,
      %128 = vector.extract_strided_slice %82 {offsets = [0, 24], sizes = [8, 8], strides = [1, 1]} : vector<8x96xf32> to vector<8x8xf32>
      %129 = arith.truncf %128 : vector<8x8xf32> to vector<8x8xbf16>
      %c3 = arith.constant 3 : index
      %c0_68 = arith.constant 0 : index
      %c0_69 = arith.constant 0 : index
      %130 = vector.load %arg9[%c3, %c0_68, %c0_69] : memref<4x8x8xbf16, #tpu.memory_space<vmem>>, vector<1x8x8xbf16>
      %131 = vector.shape_cast %130 : vector<1x8x8xbf16> to vector<8x8xbf16>
      %132 = vector.shape_cast %129 : vector<8x8xbf16> to vector<1x8x8xbf16>
      tpu.vector_store %arg9[%c3, %c0_68, %c0_69], %132 {strides = array<i32>} : memref<4x8x8xbf16, #tpu.memory_space<vmem>>, vector<1x8x8xbf16>,
      %133 = vector.extract_strided_slice %82 {offsets = [0, 56], sizes = [8, 8], strides = [1, 1]} : vector<8x96xf32> to vector<8x8xf32>
      %134 = arith.truncf %133 : vector<8x8xf32> to vector<8x8xbf16>
      %c3_70 = arith.constant 3 : index
      %c0_71 = arith.constant 0 : index
      %c0_72 = arith.constant 0 : index
      %135 = vector.load %arg10[%c3_70, %c0_71, %c0_72] : memref<4x8x8xbf16, #tpu.memory_space<vmem>>, vector<1x8x8xbf16>
      %136 = vector.shape_cast %135 : vector<1x8x8xbf16> to vector<8x8xbf16>
      %137 = vector.shape_cast %134 : vector<8x8xbf16> to vector<1x8x8xbf16>
      tpu.vector_store %arg10[%c3_70, %c0_71, %c0_72], %137 {strides = array<i32>} : memref<4x8x8xbf16, #tpu.memory_space<vmem>>, vector<1x8x8xbf16>,
      %138 = vector.extract_strided_slice %82 {offsets = [0, 88], sizes = [8, 8], strides = [1, 1]} : vector<8x96xf32> to vector<8x8xf32>
      %139 = arith.truncf %138 : vector<8x8xf32> to vector<8x8xbf16>
      %c3_73 = arith.constant 3 : index
      %c0_74 = arith.constant 0 : index
      %c0_75 = arith.constant 0 : index
      %140 = vector.load %arg11[%c3_73, %c0_74, %c0_75] : memref<4x8x8xbf16, #tpu.memory_space<vmem>>, vector<1x8x8xbf16>
      %141 = vector.shape_cast %140 : vector<1x8x8xbf16> to vector<8x8xbf16>
      %142 = vector.shape_cast %139 : vector<8x8xbf16> to vector<1x8x8xbf16>
      tpu.vector_store %arg11[%c3_73, %c0_74, %c0_75], %142 {strides = array<i32>} : memref<4x8x8xbf16, #tpu.memory_space<vmem>>, vector<1x8x8xbf16>,
    } else {
    }
    %c8_i32 = arith.constant 8 : i32
    %3 = arith.muli %arg1, %c8_i32 : i32
    %4 = tpu.assume_multiple %3, 8 : i32
    %c0 = arith.constant 0 : index
    %5 = arith.index_cast %4 : i32 to index
    %c0_1 = arith.constant 0 : index
    %6 = vector.load %arg9[%c0, %5, %c0_1] : memref<4x8x8xbf16, #tpu.memory_space<vmem>>, vector<4x8x8xbf16>
    %c0_2 = arith.constant 0 : index
    %c0_3 = arith.constant 0 : index
    %c0_4 = arith.constant 0 : index
    %7 = vector.load %arg10[%c0_2, %c0_3, %c0_4] : memref<4x8x8xbf16, #tpu.memory_space<vmem>>, vector<4x8x8xbf16>
    %c0_5 = arith.constant 0 : index
    %c0_6 = arith.constant 0 : index
    %c0_7 = arith.constant 0 : index
    %8 = vector.load %arg11[%c0_5, %c0_6, %c0_7] : memref<4x8x8xbf16, #tpu.memory_space<vmem>>, vector<4x8x8xbf16>
    "tpu.trace_start"() <{level = 10 : i32, message = "hqd,hkd->hqk"}> : () -> ()
    %cst = arith.constant dense<0.000000e+00> : vector<4x8x8xf32>
    %9 = tpu.matmul %6, %7, %cst {dimension_numbers = #tpu.dot_dimension_numbers<[2], [2], [1], [1], [0, 0, 0, 1, 1, 1], [0], [0]>} : vector<4x8x8xbf16>, vector<4x8x8xbf16>, vector<4x8x8xf32> -> vector<4x8x8xf32>
    "tpu.trace_stop"() : () -> ()
    %cst_8 = arith.constant 0.353553385 : f32
    %10 = vector.broadcast %cst_8 : f32 to vector<4x8x8xf32>
    %11 = arith.mulf %9, %10 : vector<4x8x8xf32>
    %cst_9 = arith.constant dense<0xFF800000> : vector<4x8xf32>
    %12 = vector.multi_reduction <maximumf>, %11, %cst_9 [2] : vector<4x8x8xf32> to vector<4x8xf32>
    %13 = vector.shape_cast %12 : vector<4x8xf32> to vector<4x8x1xf32>
    %14 = vector.broadcast %13 : vector<4x8x1xf32> to vector<4x8x8xf32>
    %15 = arith.subf %11, %14 : vector<4x8x8xf32>
    %16 = math.exp %15 : vector<4x8x8xf32>
    %cst_10 = arith.constant dense<0.000000e+00> : vector<4x8xf32>
    %17 = vector.multi_reduction <add>, %16, %cst_10 [2] : vector<4x8x8xf32> to vector<4x8xf32>
    %18 = vector.shape_cast %17 : vector<4x8xf32> to vector<4x8x1xf32>
    %19 = tpu.reciprocal %18 {approx = true} : vector<4x8x1xf32> -> vector<4x8x1xf32>
    %20 = vector.broadcast %19 : vector<4x8x1xf32> to vector<4x8x8xf32>
    %21 = arith.mulf %16, %20 : vector<4x8x8xf32>
    %22 = arith.truncf %21 : vector<4x8x8xf32> to vector<4x8x8xbf16>
    "tpu.trace_start"() <{level = 10 : i32, message = "hqk,hkd->hqd"}> : () -> ()
    %cst_11 = arith.constant dense<0.000000e+00> : vector<4x8x8xf32>
    %23 = tpu.matmul %22, %8, %cst_11 {dimension_numbers = #tpu.dot_dimension_numbers<[2], [1], [1], [2], [0, 0, 0, 1, 1, 2], [0], [0]>} : vector<4x8x8xbf16>, vector<4x8x8xbf16>, vector<4x8x8xf32> -> vector<4x8x8xf32>
    "tpu.trace_stop"() : () -> ()
    %24 = vector.extract_strided_slice %23 {offsets = [0, 0, 0], sizes = [1, 8, 8], strides = [1, 1, 1]} : vector<4x8x8xf32> to vector<1x8x8xf32>
    %25 = vector.shape_cast %24 : vector<1x8x8xf32> to vector<8x8xf32>
    %26 = arith.truncf %25 : vector<8x8xf32> to vector<8x8xbf16>
    %c0_12 = arith.constant 0 : index
    %c0_13 = arith.constant 0 : index
    %27 = vector.load %arg12[%c0_12, %c0_13] : memref<8x32xbf16, #tpu.memory_space<vmem>>, vector<8x8xbf16>
    tpu.vector_store %arg12[%c0_12, %c0_13], %26 {strides = array<i32>} : memref<8x32xbf16, #tpu.memory_space<vmem>>, vector<8x8xbf16>,
    %28 = vector.extract_strided_slice %23 {offsets = [1, 0, 0], sizes = [1, 8, 8], strides = [1, 1, 1]} : vector<4x8x8xf32> to vector<1x8x8xf32>
    %29 = vector.shape_cast %28 : vector<1x8x8xf32> to vector<8x8xf32>
    %30 = arith.truncf %29 : vector<8x8xf32> to vector<8x8xbf16>
    %c0_14 = arith.constant 0 : index
    %c8 = arith.constant 8 : index
    %31 = vector.load %arg12[%c0_14, %c8] : memref<8x32xbf16, #tpu.memory_space<vmem>>, vector<8x8xbf16>
    tpu.vector_store %arg12[%c0_14, %c8], %30 {strides = array<i32>} : memref<8x32xbf16, #tpu.memory_space<vmem>>, vector<8x8xbf16>,
    %32 = vector.extract_strided_slice %23 {offsets = [2, 0, 0], sizes = [1, 8, 8], strides = [1, 1, 1]} : vector<4x8x8xf32> to vector<1x8x8xf32>
    %33 = vector.shape_cast %32 : vector<1x8x8xf32> to vector<8x8xf32>
    %34 = arith.truncf %33 : vector<8x8xf32> to vector<8x8xbf16>
    %c0_15 = arith.constant 0 : index
    %c16 = arith.constant 16 : index
    %35 = vector.load %arg12[%c0_15, %c16] : memref<8x32xbf16, #tpu.memory_space<vmem>>, vector<8x8xbf16>
    tpu.vector_store %arg12[%c0_15, %c16], %34 {strides = array<i32>} : memref<8x32xbf16, #tpu.memory_space<vmem>>, vector<8x8xbf16>,
    %36 = vector.extract_strided_slice %23 {offsets = [3, 0, 0], sizes = [1, 8, 8], strides = [1, 1, 1]} : vector<4x8x8xf32> to vector<1x8x8xf32>
    %37 = vector.shape_cast %36 : vector<1x8x8xf32> to vector<8x8xf32>
    %38 = arith.truncf %37 : vector<8x8xf32> to vector<8x8xbf16>
    %c0_16 = arith.constant 0 : index
    %c24 = arith.constant 24 : index
    %39 = vector.load %arg12[%c0_16, %c24] : memref<8x32xbf16, #tpu.memory_space<vmem>>, vector<8x8xbf16>
    tpu.vector_store %arg12[%c0_16, %c24], %38 {strides = array<i32>} : memref<8x32xbf16, #tpu.memory_space<vmem>>, vector<8x8xbf16>,
    %c0_17 = arith.constant 0 : index
    %c0_18 = arith.constant 0 : index
    %40 = vector.load %arg12[%c0_17, %c0_18] : memref<8x32xbf16, #tpu.memory_space<vmem>>, vector<8x32xbf16>
    %c0_19 = arith.constant 0 : index
    %c0_20 = arith.constant 0 : index
    %41 = vector.load %arg4[%c0_19, %c0_20] : memref<32x32xbf16, #tpu.memory_space<vmem>>, vector<32x32xbf16>
    %cst_21 = arith.constant dense<0.000000e+00> : vector<8x32xf32>
    %42 = tpu.matmul %40, %41, %cst_21 {dimension_numbers = #tpu.dot_dimension_numbers<[1], [0], [0], [1], [0, 0, 1, 1], [], []>} : vector<8x32xbf16>, vector<32x32xbf16>, vector<8x32xf32> -> vector<8x32xf32>
    %43 = arith.index_cast %4 : i32 to index
    %c0_22 = arith.constant 0 : index
    %44 = vector.load %arg8[%43, %c0_22] : memref<8x32xf32, #tpu.memory_space<vmem>>, vector<8x32xf32>
    %45 = arith.addf %44, %42 : vector<8x32xf32>
    %c0_23 = arith.constant 0 : index
    %c0_24 = arith.constant 0 : index
    %c0_25 = arith.constant 0 : index
    %46 = vector.load %arg7[%c0_23, %c0_24, %c0_25] : memref<1x8x32xf32, #tpu.memory_space<vmem>>, vector<1x8x32xf32>
    %47 = vector.shape_cast %46 : vector<1x8x32xf32> to vector<8x32xf32>
    %48 = vector.shape_cast %45 : vector<8x32xf32> to vector<1x8x32xf32>
    tpu.vector_store %arg7[%c0_23, %c0_24, %c0_25], %48 {strides = array<i32>} : memref<1x8x32xf32, #tpu.memory_space<vmem>>, vector<1x8x32xf32>,
    return
  }
  func.func @transform_0(%arg0: i32, %arg1: i32) -> (i32, i32, i32) {
    %c0_i32 = arith.constant 0 : i32
    %c0_i32_0 = arith.constant 0 : i32
    %c0_i32_1 = arith.constant 0 : i32
    return %arg0, %c0_i32, %c0_i32_0 : i32, i32, i32
  }
  func.func @transform_1(%arg0: i32, %arg1: i32) -> (i32, i32) {
    %c0_i32 = arith.constant 0 : i32
    %c0_i32_0 = arith.constant 0 : i32
    %c0_i32_1 = arith.constant 0 : i32
    return %c0_i32, %c0_i32_0 : i32, i32
  }
  func.func @transform_2(%arg0: i32, %arg1: i32) -> (i32, i32) {
    %c0_i32 = arith.constant 0 : i32
    %c0_i32_0 = arith.constant 0 : i32
    %c0_i32_1 = arith.constant 0 : i32
    return %c0_i32, %c0_i32_0 : i32, i32
  }
  func.func @transform_3(%arg0: i32, %arg1: i32) -> (i32, i32) {
    %c0_i32 = arith.constant 0 : i32
    %c0_i32_0 = arith.constant 0 : i32
    %c0_i32_1 = arith.constant 0 : i32
    return %c0_i32, %c0_i32_0 : i32, i32
  }
  func.func @transform_4(%arg0: i32, %arg1: i32) -> (i32, i32) {
    %c0_i32 = arith.constant 0 : i32
    %c0_i32_0 = arith.constant 0 : i32
    %c0_i32_1 = arith.constant 0 : i32
    return %c0_i32, %c0_i32_0 : i32, i32
  }
  func.func @transform_5(%arg0: i32, %arg1: i32) -> (i32, i32, i32) {
    %c0_i32 = arith.constant 0 : i32
    %c0_i32_0 = arith.constant 0 : i32
    return %arg0, %arg1, %c0_i32 : i32, i32, i32
  }
}

</mosaic_0001>

<llo_original>
// kernel: tpu_custom_call.1
$region0: #{tpu_custom_call.1}
  #allocation0 [shape = 'u32[]', space=smem, size = 0x4, offset = 0x4, fixed_abs, tag = 'smem constant byte address 0x4 - core index']
  #allocation1 [shape = 'u32[144,128]{1,0:T(1,128)}', space=vmem, size = 0x12000, scoped, tag = 'internal scratch']
  #allocation2 [shape = 'f32[8,32]{1,0:T(8,128)}', space=vmem, size = 0x1000, scoped, tag = 'scratch operand']
  #allocation3 [shape = 'bf16[4,8,8]{2,1,0:T(8,128)(2,1)}', space=vmem, size = 0x2000, scoped, tag = 'scratch operand']
  #allocation4 [shape = 'bf16[4,8,8]{2,1,0:T(8,128)(2,1)}', space=vmem, size = 0x2000, scoped, tag = 'scratch operand']
  #allocation5 [shape = 'bf16[4,8,8]{2,1,0:T(8,128)(2,1)}', space=vmem, size = 0x2000, scoped, tag = 'scratch operand']
  #allocation6 [shape = 'bf16[8,32]{1,0:T(8,128)(2,1)}', space=vmem, size = 0x800, scoped, tag = 'scratch operand']
  %s0 = inlined_call_operand.hbm [shape: f32[2,8,32], index: 0, kind: input, shape index: {}]
  %s1 = inlined_call_operand.hbm [shape: bf16[32,96], index: 1, kind: input, shape index: {}]
  %s2 = inlined_call_operand.hbm [shape: bf16[32,32], index: 2, kind: input, shape index: {}]
  %s3 = inlined_call_operand.vmem [shape: f32[1,32], index: 3, kind: input, shape index: {}]
  %s4 = inlined_call_operand.vmem [shape: f32[1,32], index: 4, kind: input, shape index: {}]
  %s5 = inlined_call_operand.hbm [shape: f32[2,8,32], index: 5, kind: output, shape index: {}]
  %s6 = sld [smem:[#allocation0]]
  $region69: #{tpu_custom_call.1} parent=0
    _
  %s8 = ssub.s32 1, %s6
  %s9 = scalar_select 0, %s8, %s6
  $region1: #{tpu_custom_call.1} parent=0
    #allocation7 [shape = 'u8[8192]{0}', space=vmem, size = 0x2000, scoped, tag = 'input window, operand 0']
    #allocation8 [shape = 's32[2]{0}', space=sflag, size = 0x8, scoped, tag = 'scoped memory for tpu_custom_call.1']
    #allocation9 [shape = 's32[2]{0}', space=sflag, size = 0x8, scoped, tag = 'scoped memory for tpu_custom_call.1']
    #allocation10 [shape = 'u8[8192]{0}', space=vmem, size = 0x2000, scoped, tag = 'input window, operand 1, single buffered']
    #allocation11 [shape = 's32[1]{0}', space=sflag, size = 0x4, scoped, tag = 'scoped memory for tpu_custom_call.1']
    #allocation12 [shape = 'u8[8192]{0}', space=vmem, size = 0x2000, scoped, tag = 'input window, operand 2, single buffered']
    #allocation13 [shape = 'u8[8192]{0}', space=vmem, size = 0x2000, scoped, tag = 'output window, operand 0']
    %10 = vsyncpa [#allocation8], 0
    %s11 = scalar_lea.sflag [#allocation8], 1
    %12 = vsyncpa %s11, 0
    %13 = vsyncpa [#allocation11], 0
    %14 = vsyncpa [#allocation9], 0
    %s15 = scalar_lea.sflag [#allocation9], 1
    %16 = vsyncpa %s15, 0
    loop: start=0, step=1, limit=4
    $region2: #{tpu_custom_call.1} parent=1 // loop_pre_header
      _
    $region3: #{tpu_custom_call.1} parent=1 // loop_header
      %s18 = sphi 0, %s22
      %p19 = scmp.ge.s32.totalorder %s18, 4
      %s25 = sphi 0, %s37
      %s26 = sphi 0, %s33
      %s27 = sphi 0, %s25
      %s28 = sphi 0, %s26
      %s29 = sphi 0, %s27
      %s30 = sphi 0, %s28
      %s40 = sphi 0, %s42
      %s43 = sphi 0, %s40
      %s44 = sphi 0, %s43
      %s60 = sphi 0, %s44
      %s64 = sphi 0, %s64
      %s66 = sphi 0, %s64
      %s67 = sphi 0, %s66
      %s81 = sphi 0, %s67
      %s85 = sphi 0, %s85
      %s87 = sphi 0, %s85
      %s88 = sphi 0, %s87
      %s102 = sphi 0, %s88
      %s106 = sphi 0, %s106
      %s108 = sphi 0, %s106
      %s109 = sphi 0, %s108
      %s123 = sphi 0, %s109
      %s127 = sphi 0, %s127
      %s129 = sphi 0, %s127
      %s130 = sphi 0, %s129
      %s144 = sphi 0, %s130
      %s152 = sphi 0, %s154
      %s155 = sphi 0, %s152
      %s156 = sphi 0, %s155
      %s172 = sphi 0, %s156
    $region4: #{tpu_custom_call.1} parent=1 // loop_header_branch
      %21 = sbr.rel (%p19) target = $region8
    $region5: #{tpu_custom_call.1} parent=1 // loop_body
      %s23 = ssub.s32 %s18, 1
      %s24 = ssub.s32 %s18, 2
      %s31 = sadd.s32 1, %s26
      %p32 = scmp.ge.s32.totalorder %s31, 1
      %s33 = scalar_select %p32, 0, %s31
      %s34 = sadd.s32 1, %s25
      %s35 = scalar_select %p32, %s34, %s25
      %p36 = scmp.ge.s32.totalorder %s35, 2
      %s37 = scalar_select %p36, 0, %s35
      %s38 = ssub.s32 %s25, %s37
      %p39 = scmp.eq.s32.totalorder %s38, 0
      %s41 = sadd.s32 %s40, 1
      %s42 = scalar_select %p39, %s40, %s41
      %p45 = pneg %p39
      %p46 = scmp.eq.s32.totalorder %s18, 1
      %p47 = por %p45, %p46
      %p48 = scmp.ne.s32.totalorder %s40, %s43
      %p49 = scmp.eq.s32.totalorder %s18, 0
      %p50 = por %p48, %p49
      %p51 = scmp.ne.s32.totalorder %s40, %s43
      %p52 = scmp.eq.s32.totalorder %s23, 1
      %p53 = por %p51, %p52
      %p54 = scmp.ne.s32.totalorder %s43, %s44
      %p55 = scmp.eq.s32.totalorder %s23, 0
      %p56 = por %p54, %p55
      %p57 = scmp.ne.s32.totalorder %s43, %s44
      %p58 = scmp.eq.s32.totalorder %s24, 1
      %p59 = por %p57, %p58
      %p61 = scmp.ne.s32.totalorder %s44, %s60
      %p62 = scmp.eq.s32.totalorder %s24, 0
      %p63 = por %p61, %p62
      %s65 = sadd.s32 %s64, 1
      %p68 = scmp.eq.s32.totalorder %s18, 1
      %p69 = scmp.ne.s32.totalorder %s64, %s66
      %p70 = scmp.eq.s32.totalorder %s18, 0
      %p71 = por %p69, %p70
      %p72 = scmp.ne.s32.totalorder %s64, %s66
      %p73 = scmp.eq.s32.totalorder %s23, 1
      %p74 = por %p72, %p73
      %p75 = scmp.ne.s32.totalorder %s66, %s67
      %p76 = scmp.eq.s32.totalorder %s23, 0
      %p77 = por %p75, %p76
      %p78 = scmp.ne.s32.totalorder %s66, %s67
      %p79 = scmp.eq.s32.totalorder %s24, 1
      %p80 = por %p78, %p79
      %p82 = scmp.ne.s32.totalorder %s67, %s81
      %p83 = scmp.eq.s32.totalorder %s24, 0
      %p84 = por %p82, %p83
      %s86 = sadd.s32 %s85, 1
      %p89 = scmp.eq.s32.totalorder %s18, 1
      %p90 = scmp.ne.s32.totalorder %s85, %s87
      %p91 = scmp.eq.s32.totalorder %s18, 0
      %p92 = por %p90, %p91
      %p93 = scmp.ne.s32.totalorder %s85, %s87
      %p94 = scmp.eq.s32.totalorder %s23, 1
      %p95 = por %p93, %p94
      %p96 = scmp.ne.s32.totalorder %s87, %s88
      %p97 = scmp.eq.s32.totalorder %s23, 0
      %p98 = por %p96, %p97
      %p99 = scmp.ne.s32.totalorder %s87, %s88
      %p100 = scmp.eq.s32.totalorder %s24, 1
      %p101 = por %p99, %p100
      %p103 = scmp.ne.s32.totalorder %s88, %s102
      %p104 = scmp.eq.s32.totalorder %s24, 0
      %p105 = por %p103, %p104
      %s107 = sadd.s32 %s106, 1
      %p110 = scmp.eq.s32.totalorder %s18, 1
      %p111 = scmp.ne.s32.totalorder %s106, %s108
      %p112 = scmp.eq.s32.totalorder %s18, 0
      %p113 = por %p111, %p112
      %p114 = scmp.ne.s32.totalorder %s106, %s108
      %p115 = scmp.eq.s32.totalorder %s23, 1
      %p116 = por %p114, %p115
      %p117 = scmp.ne.s32.totalorder %s108, %s109
      %p118 = scmp.eq.s32.totalorder %s23, 0
      %p119 = por %p117, %p118
      %p120 = scmp.ne.s32.totalorder %s108, %s109
      %p121 = scmp.eq.s32.totalorder %s24, 1
      %p122 = por %p120, %p121
      %p124 = scmp.ne.s32.totalorder %s109, %s123
      %p125 = scmp.eq.s32.totalorder %s24, 0
      %p126 = por %p124, %p125
      %s128 = sadd.s32 %s127, 1
      %p131 = scmp.eq.s32.totalorder %s18, 1
      %p132 = scmp.ne.s32.totalorder %s127, %s129
      %p133 = scmp.eq.s32.totalorder %s18, 0
      %p134 = por %p132, %p133
      %p135 = scmp.ne.s32.totalorder %s127, %s129
      %p136 = scmp.eq.s32.totalorder %s23, 1
      %p137 = por %p135, %p136
      %p138 = scmp.ne.s32.totalorder %s129, %s130
      %p139 = scmp.eq.s32.totalorder %s23, 0
      %p140 = por %p138, %p139
      %p141 = scmp.ne.s32.totalorder %s129, %s130
      %p142 = scmp.eq.s32.totalorder %s24, 1
      %p143 = por %p141, %p142
      %p145 = scmp.ne.s32.totalorder %s130, %s144
      %p146 = scmp.eq.s32.totalorder %s24, 0
      %p147 = por %p145, %p146
      %s148 = ssub.s32 %s25, %s37
      %s149 = ssub.s32 %s26, %s33
      %s150 = sor.u32 %s148, %s149
      %p151 = scmp.eq.s32.totalorder %s150, 0
      %s153 = sadd.s32 %s152, 1
      %s154 = scalar_select %p151, %s152, %s153
      %p157 = pneg %p151
      %p158 = scmp.eq.s32.totalorder %s18, 1
      %p159 = por %p157, %p158
      %p160 = scmp.ne.s32.totalorder %s152, %s155
      %p161 = scmp.eq.s32.totalorder %s18, 0
      %p162 = por %p160, %p161
      %p163 = scmp.ne.s32.totalorder %s152, %s155
      %p164 = scmp.eq.s32.totalorder %s23, 1
      %p165 = por %p163, %p164
      %p166 = scmp.ne.s32.totalorder %s155, %s156
      %p167 = scmp.eq.s32.totalorder %s23, 0
      %p168 = por %p166, %p167
      %p169 = scmp.ne.s32.totalorder %s155, %s156
      %p170 = scmp.eq.s32.totalorder %s24, 1
      %p171 = por %p169, %p170
      %p173 = scmp.ne.s32.totalorder %s156, %s172
      %p174 = scmp.eq.s32.totalorder %s24, 0
      %p175 = por %p173, %p174
      %p176 = scmp.le.s32.totalorder 1, %s18
      %p177 = scmp.lt.s32.totalorder %s18, 3
      %p178 = pnand %p176, %p177
      %p179 = pneg %p178
      // Predicated region
      $region9: #{tpu_custom_call.1} parent=5 // pred_check
        _
      $region10: #{tpu_custom_call.1} parent=5 // pred_check_branch
        %181 = sbr.rel (%p178) target = $region12
      $region11: #{tpu_custom_call.1} parent=5 // pred_region
        %s182 = ssub.s32 %s18, 1
        // Predicated region
        $region13: #{tpu_custom_call.1} parent=11 // pred_check
          %p183 = pneg %p77
        $region14: #{tpu_custom_call.1} parent=11 // pred_check_branch
          %185 = sbr.rel (%p183) target = $region16
        $region15: #{tpu_custom_call.1} parent=11 // pred_region
          %s187 = ssub.s32 256, 256
          %188 = vsyncadd [#allocation11], %s187
          %s189 = sshll.u32 [#allocation10], 4
          %s190 = int_to_ptr.vmem [resolvable:$true] %s189
          %195 = dma.hbm_to_vmem [thread:$0]  %s1, 256, %s190, [#allocation11], 64, 64, 4
        $region16: #{tpu_custom_call.1} parent=11 // pred_fallthru
          _
        // Predicated region
        $region17: #{tpu_custom_call.1} parent=11 // pred_check
          %p196 = pneg %p98
        $region18: #{tpu_custom_call.1} parent=11 // pred_check_branch
          %198 = sbr.rel (%p196) target = $region20
        $region19: #{tpu_custom_call.1} parent=11 // pred_region
          %s200 = ssub.s32 256, 256
          %201 = vsyncadd [#allocation11], %s200
          %s202 = sshll.u32 [#allocation12], 4
          %s203 = int_to_ptr.vmem [resolvable:$true] %s202
          %208 = dma.hbm_to_vmem [thread:$0]  %s2, 256, %s203, [#allocation11], 64, 64, 4
        $region20: #{tpu_custom_call.1} parent=11 // pred_fallthru
          _
        // Predicated region
        $region21: #{tpu_custom_call.1} parent=11 // pred_check
          %p209 = pneg %p119
        $region22: #{tpu_custom_call.1} parent=11 // pred_check_branch
          %211 = sbr.rel (%p209) target = $region24
        $region23: #{tpu_custom_call.1} parent=11 // pred_region
          _
        $region24: #{tpu_custom_call.1} parent=11 // pred_fallthru
          _
        // Predicated region
        $region25: #{tpu_custom_call.1} parent=11 // pred_check
          %p212 = pneg %p140
        $region26: #{tpu_custom_call.1} parent=11 // pred_check_branch
          %214 = sbr.rel (%p212) target = $region28
        $region27: #{tpu_custom_call.1} parent=11 // pred_region
          _
        $region28: #{tpu_custom_call.1} parent=11 // pred_fallthru
          _
      $region12: #{tpu_custom_call.1} parent=5 // pred_fallthru
        _
      %p215 = scmp.lt.s32.totalorder %s18, 2
      // Predicated region
      $region29: #{tpu_custom_call.1} parent=5 // pred_check
        %p216 = pneg %p215
      $region30: #{tpu_custom_call.1} parent=5 // pred_check_branch
        %218 = sbr.rel (%p216) target = $region32
      $region31: #{tpu_custom_call.1} parent=5 // pred_region
        // Predicated region
        $region33: #{tpu_custom_call.1} parent=31 // pred_check
          %p219 = pneg %p50
        $region34: #{tpu_custom_call.1} parent=31 // pred_check_branch
          %221 = sbr.rel (%p219) target = $region36
        $region35: #{tpu_custom_call.1} parent=31 // pred_region
          %s222 = sand.u32 %s40, 1
          %s223 = scalar_lea.sflag [#allocation8], %s222
          %s224 = sand.u32 %s40, 1
          %s225 = smul.addr %s224, 8
          %s226 = scalar_lea.vmem [#allocation7], %s225
          %s228 = ssub.s32 128, 128
          %229 = vsyncadd %s223, %s228
          %s230 = smul.addr %s25, 128
          %s231 = scalar_lea.hbm %s0, %s230
          %s233 = sshll.u32 %s226, 4
          %s234 = int_to_ptr.vmem [resolvable:$true] %s233
          %236 = dma.hbm_to_vmem [thread:$0]  %s231, 128, %s234, %s223
        $region36: #{tpu_custom_call.1} parent=31 // pred_fallthru
          _
      $region32: #{tpu_custom_call.1} parent=5 // pred_fallthru
        _
      %p237 = scmp.le.s32.totalorder 1, %s18
      %p238 = scmp.lt.s32.totalorder %s18, 3
      %p239 = pnand %p237, %p238
      %p240 = pneg %p239
      // Predicated region
      $region37: #{tpu_custom_call.1} parent=5 // pred_check
        _
      $region38: #{tpu_custom_call.1} parent=5 // pred_check_branch
        %242 = sbr.rel (%p239) target = $region40
      $region39: #{tpu_custom_call.1} parent=5 // pred_region
        %s243 = ssub.s32 %s18, 1
        %s244 = sand.u32 %s43, 1
        %s245 = scalar_lea.sflag [#allocation8], %s244
        %s246 = sand.u32 %s43, 1
        %s247 = smul.addr %s246, 8
        %s248 = scalar_lea.vmem [#allocation7], %s247
        // Predicated region
        $region41: #{tpu_custom_call.1} parent=39 // pred_check
          %p249 = pneg %p56
        $region42: #{tpu_custom_call.1} parent=39 // pred_check_branch
          %251 = sbr.rel (%p249) target = $region44
        $region43: #{tpu_custom_call.1} parent=39 // pred_region
          %252 = dma.done %s245, 128
        $region44: #{tpu_custom_call.1} parent=39 // pred_fallthru
          _
        // Predicated region
        $region45: #{tpu_custom_call.1} parent=39 // pred_check
          %p253 = pneg %p77
        $region46: #{tpu_custom_call.1} parent=39 // pred_check_branch
          %255 = sbr.rel (%p253) target = $region48
        $region47: #{tpu_custom_call.1} parent=39 // pred_region
          %256 = dma.done [#allocation11], 256
        $region48: #{tpu_custom_call.1} parent=39 // pred_fallthru
          _
        // Predicated region
        $region49: #{tpu_custom_call.1} parent=39 // pred_check
          %p257 = pneg %p98
        $region50: #{tpu_custom_call.1} parent=39 // pred_check_branch
          %259 = sbr.rel (%p257) target = $region52
        $region51: #{tpu_custom_call.1} parent=39 // pred_region
          %260 = dma.done [#allocation11], 256
        $region52: #{tpu_custom_call.1} parent=39 // pred_fallthru
          _
        %s261 = sand.u32 %s43, 1
        %s262 = scalar_lea.sflag [#allocation8], %s261
        %s263 = sand.u32 %s43, 1
        %s264 = smul.addr %s263, 8
        %s265 = scalar_lea.vmem [#allocation7], %s264
        %p266 = pneg %p56
        %p267 = pneg %p53
        %p268 = pneg %p77
        %p269 = pneg %p74
        %p270 = pneg %p98
        %p271 = pneg %p95
        %p272 = pneg %p119
        %p273 = pneg %p116
        %p274 = pneg %p140
        %p275 = pneg %p137
        %p276 = pneg %p168
        %p277 = pneg %p165
        %s278 = sand.u32 %s155, 1
        %s279 = scalar_lea.sflag [#allocation9], %s278
        %s280 = sand.u32 %s155, 1
        %s281 = smul.addr %s280, 8
        %s282 = scalar_lea.vmem [#allocation13], %s281
        %p284 = scmp.eq.s32.totalorder %s28, 0
        // Predicated region
        $region53: #{tpu_custom_call.1} parent=39 // pred_check
          %p285 = pneg %p284
        $region54: #{tpu_custom_call.1} parent=39 // pred_check_branch
          %287 = sbr.rel (%p285) target = $region56
        $region55: #{tpu_custom_call.1} parent=39 // pred_region
          %v288 = vld [vmem:[%s248] sm:$0xff]
          %vm289 = vcmask 261120
          %v290 = vsel %vm289, %v288, 0.0
          %291 = vadd.xlane.f32.xlu0 %v290
          %v292 = vpop.xlane.xlu0 %291
          %v293 = vrcp.pop 32.0
          %v294 = vmul.f32 %v292, %v293
          %v295 = vsub.f32 %v288, %v294
          %v296 = vmul.f32 %v295, %v295
          %v297 = vsel %vm289, %v296, 0.0
          %298 = vadd.xlane.f32.xlu0 %v297
          %v299 = vpop.xlane.xlu0 %298
          %v300 = vmul.f32 %v299, %v293
          %v301 = vadd.f32 %v300, 1e-05
          %v302 = vrsqrt.pop %v301
          %v303 = vmul.f32 %v295, %v302
          %v304 = vld [vmem:[%s3] sm:$0x1]
          %v306 = vlaneseq
          %v307 = vshrl.u32 %v306, 7
          %v308 = vsub.s32 0, %v307
          %v309 = vrot.slane %v304, %v308
          %v311 = vmul.f32 %v303, %v309
          %v312 = vld [vmem:[%s4] sm:$0x1]
          %v314 = vlaneseq
          %v315 = vshrl.u32 %v314, 7
          %v316 = vsub.s32 0, %v315
          %v317 = vrot.slane %v312, %v316
          %v319 = vadd.f32 %v311, %v317
          %320 = vst.msk [vmem:[#allocation2] sm:$0xff] %vm289, %v319
          %v321 = vpack.c.bf16 %v319, %v319
          %v322 = vld [vmem:[#allocation10] sm:$0xf]
          %v323 = vld [vmem:[#allocation10 + $0x4] sm:$0xf]
          %v324 = vld [vmem:[#allocation10 + $0x8] sm:$0xf]
          %v325 = vld [vmem:[#allocation10 + $0xc] sm:$0xf]
          %v330 = vunpack.c.l.b16 %v322
          %v331 = vunpack.c.l.b16 %v323
          %v332 = vunpack.c.l.b16 %v324
          %v333 = vunpack.c.l.b16 %v325
          %v334 = vpack.c.b16 %v331, %v330
          %v335 = vpack.c.b16 %v333, %v332
          %v339 = vsel %vm289, %v321, 0
          %341 = vmatprep.subr.bf16.mxu0 0
          %342 = vmatpush1.bf16.msra.mxu0 %v334
          %343 = vmatprep.subr.bf16.mxu0 0
          %344 = vmatpush1.bf16.msra.mxu0 %v335
          %345 = vmatprep.subr.bf16.mxu0 0
          %346 = vmatpush1.bf16.msra.mxu0 0
          %347 = vmatprep.subr.bf16.mxu0 0
          %348 = vmatpush1.bf16.msra.mxu0 0
          %349 = vmatprep.subr.bf16.mxu0 0
          %350 = vmatpush1.bf16.msra.mxu0 0
          %351 = vmatprep.subr.bf16.mxu0 0
          %352 = vmatpush1.bf16.msra.mxu0 0
          %353 = vmatprep.subr.bf16.mxu0 0
          %354 = vmatpush1.bf16.msra.mxu0 0
          %355 = vmatprep.subr.bf16.mxu0 0
          %356 = vmatpush1.bf16.msra.mxu0 0
          %357 = vmatprep.subr.bf16.mxu0 0
          %358 = vmatpush1.bf16.msra.mxu0 0
          %359 = vmatprep.subr.bf16.mxu0 0
          %360 = vmatpush1.bf16.msra.mxu0 0
          %361 = vmatprep.subr.bf16.mxu0 0
          %362 = vmatpush1.bf16.msra.mxu0 0
          %363 = vmatprep.subr.bf16.mxu0 0
          %364 = vmatpush1.bf16.msra.mxu0 0
          %365 = vmatprep.subr.bf16.mxu0 0
          %366 = vmatpush1.bf16.msra.mxu0 0
          %367 = vmatprep.subr.bf16.mxu0 0
          %368 = vmatpush1.bf16.msra.mxu0 0
          %369 = vmatprep.subr.bf16.mxu0 0
          %370 = vmatpush1.bf16.msra.mxu0 0
          %371 = vmatprep.subr.bf16.mxu0 0
          %372 = vmatpush1.bf16.msra.mxu0 0
          %373 = vmatprep.mubr.bf16.mxu0 0
          %374 = vmatmul.mubr.bf16.gmra.mrb[0].mxu0 %v339
          %v375 = vpop.f32.mrb[0].mxu0
          %v376 = vadd.f32 0.0, %v375
          %v377 = vpop.f32.mrb[0].mxu0
          %v378 = vpop.f32.mrb[0].mxu0
          %v379 = vpop.f32.mrb[0].mxu0
          %380 = vdwg.mxu0
          %v381 = vpack.c.bf16 %v376, %v376
          %vm382 = vcmask 60416
          %383 = vst.msk [vmem:[#allocation3] sm:$0xf] %vm382, %v381
          %v385 = vunpack.c.l.b16 %v381
          %v386 = vpack.c.b16 %v385, %v385
          %387 = vrot.lane.b32.xlu0 %v386, 96
          %v388 = vpop.permute.xlu0 %387
          %390 = vst.msk [vmem:[#allocation4] sm:$0xf] %vm382, %v388
          %391 = vrot.lane.b32.xlu0 %v386, 64
          %v392 = vpop.permute.xlu0 %391
          %394 = vst.msk [vmem:[#allocation5] sm:$0xf] %vm382, %v392
          %395 = vrot.lane.b32.xlu0 %v386, 120
          %v396 = vpop.permute.xlu0 %395
          %s398 = scalar_lea.vmem [#allocation3], 4
          %399 = vst.msk [vmem:[%s398] sm:$0xf] %vm382, %v396
          %400 = vrot.lane.b32.xlu0 %v386, 88
          %v401 = vpop.permute.xlu0 %400
          %s403 = scalar_lea.vmem [#allocation4], 4
          %404 = vst.msk [vmem:[%s403] sm:$0xf] %vm382, %v401
          %405 = vrot.lane.b32.xlu0 %v386, 56
          %v406 = vpop.permute.xlu0 %405
          %s408 = scalar_lea.vmem [#allocation5], 4
          %409 = vst.msk [vmem:[%s408] sm:$0xf] %vm382, %v406
          %410 = vrot.lane.b32.xlu0 %v386, 112
          %v411 = vpop.permute.xlu0 %410
          %s413 = scalar_lea.vmem [#allocation3], 8
          %414 = vst.msk [vmem:[%s413] sm:$0xf] %vm382, %v411
          %415 = vrot.lane.b32.xlu0 %v386, 80
          %v416 = vpop.permute.xlu0 %415
          %s418 = scalar_lea.vmem [#allocation4], 8
          %419 = vst.msk [vmem:[%s418] sm:$0xf] %vm382, %v416
          %420 = vrot.lane.b32.xlu0 %v386, 48
          %v421 = vpop.permute.xlu0 %420
          %s423 = scalar_lea.vmem [#allocation5], 8
          %424 = vst.msk [vmem:[%s423] sm:$0xf] %vm382, %v421
          %425 = vrot.lane.b32.xlu0 %v386, 104
          %v426 = vpop.permute.xlu0 %425
          %s428 = scalar_lea.vmem [#allocation3], 12
          %429 = vst.msk [vmem:[%s428] sm:$0xf] %vm382, %v426
          %430 = vrot.lane.b32.xlu0 %v386, 72
          %v431 = vpop.permute.xlu0 %430
          %s433 = scalar_lea.vmem [#allocation4], 12
          %434 = vst.msk [vmem:[%s433] sm:$0xf] %vm382, %v431
          %435 = vrot.lane.b32.xlu0 %v386, 40
          %v436 = vpop.permute.xlu0 %435
          %s438 = scalar_lea.vmem [#allocation5], 12
          %439 = vst.msk [vmem:[%s438] sm:$0xf] %vm382, %v436
        $region56: #{tpu_custom_call.1} parent=39 // pred_fallthru
          _
        %s440 = smul.u32 %s28, 8
        %s441 = sshra.s32 %s440, 3
        %s442 = sand.u32 %s440, 7
        %s443 = smul.addr %s441, 4
        %s444 = scalar_lea.vmem [#allocation3], %s443
        %v445 = vld [vmem:[%s444] sm:$0xf]
        %v446 = vld [vmem:[%s444 + $0x4] sm:$0xf]
        %v447 = vld [vmem:[%s444 + $0x8] sm:$0xf]
        %v448 = vld [vmem:[%s444 + $0xc] sm:$0xf]
        %v449 = vld [vmem:[#allocation4] sm:$0xf]
        %v450 = vld [vmem:[#allocation4 + $0x4] sm:$0xf]
        %v451 = vld [vmem:[#allocation4 + $0x8] sm:$0xf]
        %v452 = vld [vmem:[#allocation4 + $0xc] sm:$0xf]
        %v453 = vld [vmem:[#allocation5] sm:$0xf]
        %v454 = vld [vmem:[#allocation5 + $0x4] sm:$0xf]
        %v455 = vld [vmem:[#allocation5 + $0x8] sm:$0xf]
        %v456 = vld [vmem:[#allocation5 + $0xc] sm:$0xf]
        %vm457 = vcmask 64512
        %v459 = vsel %vm457, %v445, 0
        %v462 = vsel %vm457, %v449, 0
        %464 = vmatprep.subr.bf16.mxu0 0
        %465 = vmatpush1.bf16.xpose.msra.mxu0 %v462
        %466 = vmatprep.subr.bf16.mxu0 0
        %467 = vmatpush1.bf16.xpose.msra.mxu0 0
        %468 = vmatprep.subr.bf16.mxu0 0
        %469 = vmatpush1.bf16.xpose.msra.mxu0 0
        %470 = vmatprep.subr.bf16.mxu0 0
        %471 = vmatpush1.bf16.xpose.msra.mxu0 0
        %472 = vmatprep.subr.bf16.mxu0 0
        %473 = vmatpush1.bf16.xpose.msra.mxu0 0
        %474 = vmatprep.subr.bf16.mxu0 0
        %475 = vmatpush1.bf16.xpose.msra.mxu0 0
        %476 = vmatprep.subr.bf16.mxu0 0
        %477 = vmatpush1.bf16.xpose.msra.mxu0 0
        %478 = vmatprep.subr.bf16.mxu0 0
        %479 = vmatpush1.bf16.xpose.msra.mxu0 0
        %480 = vmatprep.subr.bf16.mxu0 0
        %481 = vmatpush1.bf16.xpose.msra.mxu0 0
        %482 = vmatprep.subr.bf16.mxu0 0
        %483 = vmatpush1.bf16.xpose.msra.mxu0 0
        %484 = vmatprep.subr.bf16.mxu0 0
        %485 = vmatpush1.bf16.xpose.msra.mxu0 0
        %486 = vmatprep.subr.bf16.mxu0 0
        %487 = vmatpush1.bf16.xpose.msra.mxu0 0
        %488 = vmatprep.subr.bf16.mxu0 0
        %489 = vmatpush1.bf16.xpose.msra.mxu0 0
        %490 = vmatprep.subr.bf16.mxu0 0
        %491 = vmatpush1.bf16.xpose.msra.mxu0 0
        %492 = vmatprep.subr.bf16.mxu0 0
        %493 = vmatpush1.bf16.xpose.msra.mxu0 0
        %494 = vmatprep.subr.bf16.mxu0 0
        %495 = vmatpush1.bf16.xpose.msra.mxu0 0
        %496 = vmatprep.mubr.bf16.mxu0 0
        %497 = vmatmul.mubr.bf16.gmra.mrb[0].mxu0 %v459
        %v498 = vpop.f32.mrb[0].mxu0
        %v499 = vadd.f32 0.0, %v498
        %v500 = vpop.f32.mrb[0].mxu0
        %v501 = vpop.f32.mrb[0].mxu0
        %v502 = vpop.f32.mrb[0].mxu0
        %503 = vdwg.mxu0
        %v505 = vsel %vm457, %v446, 0
        %v508 = vsel %vm457, %v450, 0
        %510 = vmatprep.subr.bf16.mxu0 0
        %511 = vmatpush1.bf16.xpose.msra.mxu0 %v508
        %512 = vmatprep.subr.bf16.mxu0 0
        %513 = vmatpush1.bf16.xpose.msra.mxu0 0
        %514 = vmatprep.subr.bf16.mxu0 0
        %515 = vmatpush1.bf16.xpose.msra.mxu0 0
        %516 = vmatprep.subr.bf16.mxu0 0
        %517 = vmatpush1.bf16.xpose.msra.mxu0 0
        %518 = vmatprep.subr.bf16.mxu0 0
        %519 = vmatpush1.bf16.xpose.msra.mxu0 0
        %520 = vmatprep.subr.bf16.mxu0 0
        %521 = vmatpush1.bf16.xpose.msra.mxu0 0
        %522 = vmatprep.subr.bf16.mxu0 0
        %523 = vmatpush1.bf16.xpose.msra.mxu0 0
        %524 = vmatprep.subr.bf16.mxu0 0
        %525 = vmatpush1.bf16.xpose.msra.mxu0 0
        %526 = vmatprep.subr.bf16.mxu0 0
        %527 = vmatpush1.bf16.xpose.msra.mxu0 0
        %528 = vmatprep.subr.bf16.mxu0 0
        %529 = vmatpush1.bf16.xpose.msra.mxu0 0
        %530 = vmatprep.subr.bf16.mxu0 0
        %531 = vmatpush1.bf16.xpose.msra.mxu0 0
        %532 = vmatprep.subr.bf16.mxu0 0
        %533 = vmatpush1.bf16.xpose.msra.mxu0 0
        %534 = vmatprep.subr.bf16.mxu0 0
        %535 = vmatpush1.bf16.xpose.msra.mxu0 0
        %536 = vmatprep.subr.bf16.mxu0 0
        %537 = vmatpush1.bf16.xpose.msra.mxu0 0
        %538 = vmatprep.subr.bf16.mxu0 0
        %539 = vmatpush1.bf16.xpose.msra.mxu0 0
        %540 = vmatprep.subr.bf16.mxu0 0
        %541 = vmatpush1.bf16.xpose.msra.mxu0 0
        %542 = vmatprep.mubr.bf16.mxu0 0
        %543 = vmatmul.mubr.bf16.gmra.mrb[0].mxu0 %v505
        %v544 = vpop.f32.mrb[0].mxu0
        %v545 = vadd.f32 0.0, %v544
        %v546 = vpop.f32.mrb[0].mxu0
        %v547 = vpop.f32.mrb[0].mxu0
        %v548 = vpop.f32.mrb[0].mxu0
        %549 = vdwg.mxu0
        %v551 = vsel %vm457, %v447, 0
        %v554 = vsel %vm457, %v451, 0
        %556 = vmatprep.subr.bf16.mxu0 0
        %557 = vmatpush1.bf16.xpose.msra.mxu0 %v554
        %558 = vmatprep.subr.bf16.mxu0 0
        %559 = vmatpush1.bf16.xpose.msra.mxu0 0
        %560 = vmatprep.subr.bf16.mxu0 0
        %561 = vmatpush1.bf16.xpose.msra.mxu0 0
        %562 = vmatprep.subr.bf16.mxu0 0
        %563 = vmatpush1.bf16.xpose.msra.mxu0 0
        %564 = vmatprep.subr.bf16.mxu0 0
        %565 = vmatpush1.bf16.xpose.msra.mxu0 0
        %566 = vmatprep.subr.bf16.mxu0 0
        %567 = vmatpush1.bf16.xpose.msra.mxu0 0
        %568 = vmatprep.subr.bf16.mxu0 0
        %569 = vmatpush1.bf16.xpose.msra.mxu0 0
        %570 = vmatprep.subr.bf16.mxu0 0
        %571 = vmatpush1.bf16.xpose.msra.mxu0 0
        %572 = vmatprep.subr.bf16.mxu0 0
        %573 = vmatpush1.bf16.xpose.msra.mxu0 0
        %574 = vmatprep.subr.bf16.mxu0 0
        %575 = vmatpush1.bf16.xpose.msra.mxu0 0
        %576 = vmatprep.subr.bf16.mxu0 0
        %577 = vmatpush1.bf16.xpose.msra.mxu0 0
        %578 = vmatprep.subr.bf16.mxu0 0
        %579 = vmatpush1.bf16.xpose.msra.mxu0 0
        %580 = vmatprep.subr.bf16.mxu0 0
        %581 = vmatpush1.bf16.xpose.msra.mxu0 0
        %582 = vmatprep.subr.bf16.mxu0 0
        %583 = vmatpush1.bf16.xpose.msra.mxu0 0
        %584 = vmatprep.subr.bf16.mxu0 0
        %585 = vmatpush1.bf16.xpose.msra.mxu0 0
        %586 = vmatprep.subr.bf16.mxu0 0
        %587 = vmatpush1.bf16.xpose.msra.mxu0 0
        %588 = vmatprep.mubr.bf16.mxu0 0
        %589 = vmatmul.mubr.bf16.gmra.mrb[0].mxu0 %v551
        %v590 = vpop.f32.mrb[0].mxu0
        %v591 = vadd.f32 0.0, %v590
        %v592 = vpop.f32.mrb[0].mxu0
        %v593 = vpop.f32.mrb[0].mxu0
        %v594 = vpop.f32.mrb[0].mxu0
        %595 = vdwg.mxu0
        %v597 = vsel %vm457, %v448, 0
        %v600 = vsel %vm457, %v452, 0
        %602 = vmatprep.subr.bf16.mxu0 0
        %603 = vmatpush1.bf16.xpose.msra.mxu0 %v600
        %604 = vmatprep.subr.bf16.mxu0 0
        %605 = vmatpush1.bf16.xpose.msra.mxu0 0
        %606 = vmatprep.subr.bf16.mxu0 0
        %607 = vmatpush1.bf16.xpose.msra.mxu0 0
        %608 = vmatprep.subr.bf16.mxu0 0
        %609 = vmatpush1.bf16.xpose.msra.mxu0 0
        %610 = vmatprep.subr.bf16.mxu0 0
        %611 = vmatpush1.bf16.xpose.msra.mxu0 0
        %612 = vmatprep.subr.bf16.mxu0 0
        %613 = vmatpush1.bf16.xpose.msra.mxu0 0
        %614 = vmatprep.subr.bf16.mxu0 0
        %615 = vmatpush1.bf16.xpose.msra.mxu0 0
        %616 = vmatprep.subr.bf16.mxu0 0
        %617 = vmatpush1.bf16.xpose.msra.mxu0 0
        %618 = vmatprep.subr.bf16.mxu0 0
        %619 = vmatpush1.bf16.xpose.msra.mxu0 0
        %620 = vmatprep.subr.bf16.mxu0 0
        %621 = vmatpush1.bf16.xpose.msra.mxu0 0
        %622 = vmatprep.subr.bf16.mxu0 0
        %623 = vmatpush1.bf16.xpose.msra.mxu0 0
        %624 = vmatprep.subr.bf16.mxu0 0
        %625 = vmatpush1.bf16.xpose.msra.mxu0 0
        %626 = vmatprep.subr.bf16.mxu0 0
        %627 = vmatpush1.bf16.xpose.msra.mxu0 0
        %628 = vmatprep.subr.bf16.mxu0 0
        %629 = vmatpush1.bf16.xpose.msra.mxu0 0
        %630 = vmatprep.subr.bf16.mxu0 0
        %631 = vmatpush1.bf16.xpose.msra.mxu0 0
        %632 = vmatprep.subr.bf16.mxu0 0
        %633 = vmatpush1.bf16.xpose.msra.mxu0 0
        %634 = vmatprep.mubr.bf16.mxu0 0
        %635 = vmatmul.mubr.bf16.gmra.mrb[0].mxu0 %v597
        %v636 = vpop.f32.mrb[0].mxu0
        %v637 = vadd.f32 0.0, %v636
        %v638 = vpop.f32.mrb[0].mxu0
        %v639 = vpop.f32.mrb[0].mxu0
        %v640 = vpop.f32.mrb[0].mxu0
        %641 = vdwg.mxu0
        %v642 = vmul.f32 %v499, 0.35355338
        %v643 = vmul.f32 %v545, 0.35355338
        %v644 = vmul.f32 %v591, 0.35355338
        %v645 = vmul.f32 %v637, 0.35355338
        %v646 = vsel %vm457, %v642, -inf
        %647 = vmax.xlane.f32.xlu0 %v646
        %v648 = vpop.xlane.xlu0 %647
        %v649 = vsel %vm457, %v643, -inf
        %650 = vmax.xlane.f32.xlu0 %v649
        %v651 = vpop.xlane.xlu0 %650
        %v652 = vsel %vm457, %v644, -inf
        %653 = vmax.xlane.f32.xlu0 %v652
        %v654 = vpop.xlane.xlu0 %653
        %v655 = vsel %vm457, %v645, -inf
        %656 = vmax.xlane.f32.xlu0 %v655
        %v657 = vpop.xlane.xlu0 %656
        %v658 = vsub.f32 %v642, %v648
        %v659 = vsub.f32 %v643, %v651
        %v660 = vsub.f32 %v644, %v654
        %v661 = vsub.f32 %v645, %v657
        %v662 = vmul.f32 %v658, 1.442695
        %v663 = vpow.pop %v662
        %v664 = vmul.f32 %v659, 1.442695
        %v665 = vpow.pop %v664
        %v666 = vmul.f32 %v660, 1.442695
        %v667 = vpow.pop %v666
        %v668 = vmul.f32 %v661, 1.442695
        %v669 = vpow.pop %v668
        %v670 = vsel %vm457, %v663, 0.0
        %671 = vadd.xlane.f32.xlu0 %v670
        %v672 = vpop.xlane.xlu0 %671
        %v673 = vsel %vm457, %v665, 0.0
        %674 = vadd.xlane.f32.xlu0 %v673
        %v675 = vpop.xlane.xlu0 %674
        %v676 = vsel %vm457, %v667, 0.0
        %677 = vadd.xlane.f32.xlu0 %v676
        %v678 = vpop.xlane.xlu0 %677
        %v679 = vsel %vm457, %v669, 0.0
        %680 = vadd.xlane.f32.xlu0 %v679
        %v681 = vpop.xlane.xlu0 %680
        %v682 = vrcp.pop %v672
        %v683 = vrcp.pop %v675
        %v684 = vrcp.pop %v678
        %v685 = vrcp.pop %v681
        %v686 = vmul.f32 %v663, %v682
        %v687 = vmul.f32 %v665, %v683
        %v688 = vmul.f32 %v667, %v684
        %v689 = vmul.f32 %v669, %v685
        %v690 = vpack.c.bf16 %v686, %v686
        %v691 = vpack.c.bf16 %v687, %v687
        %v692 = vpack.c.bf16 %v688, %v688
        %v693 = vpack.c.bf16 %v689, %v689
        %v695 = vsel %vm457, %v690, 0
        %vm697 = vcmask 1043456
        %v699 = vsel %vm697, %v453, 0
        %701 = vmatprep.subr.bf16.mxu0 0
        %702 = vmatpush1.bf16.msra.mxu0 %v699
        %703 = vmatprep.subr.bf16.mxu0 0
        %704 = vmatpush1.bf16.msra.mxu0 0
        %705 = vmatprep.subr.bf16.mxu0 0
        %706 = vmatpush1.bf16.msra.mxu0 0
        %707 = vmatprep.subr.bf16.mxu0 0
        %708 = vmatpush1.bf16.msra.mxu0 0
        %709 = vmatprep.subr.bf16.mxu0 0
        %710 = vmatpush1.bf16.msra.mxu0 0
        %711 = vmatprep.subr.bf16.mxu0 0
        %712 = vmatpush1.bf16.msra.mxu0 0
        %713 = vmatprep.subr.bf16.mxu0 0
        %714 = vmatpush1.bf16.msra.mxu0 0
        %715 = vmatprep.subr.bf16.mxu0 0
        %716 = vmatpush1.bf16.msra.mxu0 0
        %717 = vmatprep.subr.bf16.mxu0 0
        %718 = vmatpush1.bf16.msra.mxu0 0
        %719 = vmatprep.subr.bf16.mxu0 0
        %720 = vmatpush1.bf16.msra.mxu0 0
        %721 = vmatprep.subr.bf16.mxu0 0
        %722 = vmatpush1.bf16.msra.mxu0 0
        %723 = vmatprep.subr.bf16.mxu0 0
        %724 = vmatpush1.bf16.msra.mxu0 0
        %725 = vmatprep.subr.bf16.mxu0 0
        %726 = vmatpush1.bf16.msra.mxu0 0
        %727 = vmatprep.subr.bf16.mxu0 0
        %728 = vmatpush1.bf16.msra.mxu0 0
        %729 = vmatprep.subr.bf16.mxu0 0
        %730 = vmatpush1.bf16.msra.mxu0 0
        %731 = vmatprep.subr.bf16.mxu0 0
        %732 = vmatpush1.bf16.msra.mxu0 0
        %733 = vmatprep.mubr.bf16.mxu0 0
        %734 = vmatmul.mubr.bf16.gmra.mrb[0].mxu0 %v695
        %v735 = vpop.f32.mrb[0].mxu0
        %v736 = vadd.f32 0.0, %v735
        %v737 = vpop.f32.mrb[0].mxu0
        %v738 = vpop.f32.mrb[0].mxu0
        %v739 = vpop.f32.mrb[0].mxu0
        %740 = vdwg.mxu0
        %v742 = vsel %vm457, %v691, 0
        %v745 = vsel %vm697, %v454, 0
        %747 = vmatprep.subr.bf16.mxu0 0
        %748 = vmatpush1.bf16.msra.mxu0 %v745
        %749 = vmatprep.subr.bf16.mxu0 0
        %750 = vmatpush1.bf16.msra.mxu0 0
        %751 = vmatprep.subr.bf16.mxu0 0
        %752 = vmatpush1.bf16.msra.mxu0 0
        %753 = vmatprep.subr.bf16.mxu0 0
        %754 = vmatpush1.bf16.msra.mxu0 0
        %755 = vmatprep.subr.bf16.mxu0 0
        %756 = vmatpush1.bf16.msra.mxu0 0
        %757 = vmatprep.subr.bf16.mxu0 0
        %758 = vmatpush1.bf16.msra.mxu0 0
        %759 = vmatprep.subr.bf16.mxu0 0
        %760 = vmatpush1.bf16.msra.mxu0 0
        %761 = vmatprep.subr.bf16.mxu0 0
        %762 = vmatpush1.bf16.msra.mxu0 0
        %763 = vmatprep.subr.bf16.mxu0 0
        %764 = vmatpush1.bf16.msra.mxu0 0
        %765 = vmatprep.subr.bf16.mxu0 0
        %766 = vmatpush1.bf16.msra.mxu0 0
        %767 = vmatprep.subr.bf16.mxu0 0
        %768 = vmatpush1.bf16.msra.mxu0 0
        %769 = vmatprep.subr.bf16.mxu0 0
        %770 = vmatpush1.bf16.msra.mxu0 0
        %771 = vmatprep.subr.bf16.mxu0 0
        %772 = vmatpush1.bf16.msra.mxu0 0
        %773 = vmatprep.subr.bf16.mxu0 0
        %774 = vmatpush1.bf16.msra.mxu0 0
        %775 = vmatprep.subr.bf16.mxu0 0
        %776 = vmatpush1.bf16.msra.mxu0 0
        %777 = vmatprep.subr.bf16.mxu0 0
        %778 = vmatpush1.bf16.msra.mxu0 0
        %779 = vmatprep.mubr.bf16.mxu0 0
        %780 = vmatmul.mubr.bf16.gmra.mrb[0].mxu0 %v742
        %v781 = vpop.f32.mrb[0].mxu0
        %v782 = vadd.f32 0.0, %v781
        %v783 = vpop.f32.mrb[0].mxu0
        %v784 = vpop.f32.mrb[0].mxu0
        %v785 = vpop.f32.mrb[0].mxu0
        %786 = vdwg.mxu0
        %v788 = vsel %vm457, %v692, 0
        %v791 = vsel %vm697, %v455, 0
        %793 = vmatprep.subr.bf16.mxu0 0
        %794 = vmatpush1.bf16.msra.mxu0 %v791
        %795 = vmatprep.subr.bf16.mxu0 0
        %796 = vmatpush1.bf16.msra.mxu0 0
        %797 = vmatprep.subr.bf16.mxu0 0
        %798 = vmatpush1.bf16.msra.mxu0 0
        %799 = vmatprep.subr.bf16.mxu0 0
        %800 = vmatpush1.bf16.msra.mxu0 0
        %801 = vmatprep.subr.bf16.mxu0 0
        %802 = vmatpush1.bf16.msra.mxu0 0
        %803 = vmatprep.subr.bf16.mxu0 0
        %804 = vmatpush1.bf16.msra.mxu0 0
        %805 = vmatprep.subr.bf16.mxu0 0
        %806 = vmatpush1.bf16.msra.mxu0 0
        %807 = vmatprep.subr.bf16.mxu0 0
        %808 = vmatpush1.bf16.msra.mxu0 0
        %809 = vmatprep.subr.bf16.mxu0 0
        %810 = vmatpush1.bf16.msra.mxu0 0
        %811 = vmatprep.subr.bf16.mxu0 0
        %812 = vmatpush1.bf16.msra.mxu0 0
        %813 = vmatprep.subr.bf16.mxu0 0
        %814 = vmatpush1.bf16.msra.mxu0 0
        %815 = vmatprep.subr.bf16.mxu0 0
        %816 = vmatpush1.bf16.msra.mxu0 0
        %817 = vmatprep.subr.bf16.mxu0 0
        %818 = vmatpush1.bf16.msra.mxu0 0
        %819 = vmatprep.subr.bf16.mxu0 0
        %820 = vmatpush1.bf16.msra.mxu0 0
        %821 = vmatprep.subr.bf16.mxu0 0
        %822 = vmatpush1.bf16.msra.mxu0 0
        %823 = vmatprep.subr.bf16.mxu0 0
        %824 = vmatpush1.bf16.msra.mxu0 0
        %825 = vmatprep.mubr.bf16.mxu0 0
        %826 = vmatmul.mubr.bf16.gmra.mrb[0].mxu0 %v788
        %v827 = vpop.f32.mrb[0].mxu0
        %v828 = vadd.f32 0.0, %v827
        %v829 = vpop.f32.mrb[0].mxu0
        %v830 = vpop.f32.mrb[0].mxu0
        %v831 = vpop.f32.mrb[0].mxu0
        %832 = vdwg.mxu0
        %v834 = vsel %vm457, %v693, 0
        %v837 = vsel %vm697, %v456, 0
        %839 = vmatprep.subr.bf16.mxu0 0
        %840 = vmatpush1.bf16.msra.mxu0 %v837
        %841 = vmatprep.subr.bf16.mxu0 0
        %842 = vmatpush1.bf16.msra.mxu0 0
        %843 = vmatprep.subr.bf16.mxu0 0
        %844 = vmatpush1.bf16.msra.mxu0 0
        %845 = vmatprep.subr.bf16.mxu0 0
        %846 = vmatpush1.bf16.msra.mxu0 0
        %847 = vmatprep.subr.bf16.mxu0 0
        %848 = vmatpush1.bf16.msra.mxu0 0
        %849 = vmatprep.subr.bf16.mxu0 0
        %850 = vmatpush1.bf16.msra.mxu0 0
        %851 = vmatprep.subr.bf16.mxu0 0
        %852 = vmatpush1.bf16.msra.mxu0 0
        %853 = vmatprep.subr.bf16.mxu0 0
        %854 = vmatpush1.bf16.msra.mxu0 0
        %855 = vmatprep.subr.bf16.mxu0 0
        %856 = vmatpush1.bf16.msra.mxu0 0
        %857 = vmatprep.subr.bf16.mxu0 0
        %858 = vmatpush1.bf16.msra.mxu0 0
        %859 = vmatprep.subr.bf16.mxu0 0
        %860 = vmatpush1.bf16.msra.mxu0 0
        %861 = vmatprep.subr.bf16.mxu0 0
        %862 = vmatpush1.bf16.msra.mxu0 0
        %863 = vmatprep.subr.bf16.mxu0 0
        %864 = vmatpush1.bf16.msra.mxu0 0
        %865 = vmatprep.subr.bf16.mxu0 0
        %866 = vmatpush1.bf16.msra.mxu0 0
        %867 = vmatprep.subr.bf16.mxu0 0
        %868 = vmatpush1.bf16.msra.mxu0 0
        %869 = vmatprep.subr.bf16.mxu0 0
        %870 = vmatpush1.bf16.msra.mxu0 0
        %871 = vmatprep.mubr.bf16.mxu0 0
        %872 = vmatmul.mubr.bf16.gmra.mrb[0].mxu0 %v834
        %v873 = vpop.f32.mrb[0].mxu0
        %v874 = vadd.f32 0.0, %v873
        %v875 = vpop.f32.mrb[0].mxu0
        %v876 = vpop.f32.mrb[0].mxu0
        %v877 = vpop.f32.mrb[0].mxu0
        %878 = vdwg.mxu0
        %v879 = vpack.c.bf16 %v736, %v736
        %vm880 = vcmask 60416
        %881 = vst.msk [vmem:[#allocation6] sm:$0xf] %vm880, %v879
        %v882 = vpack.c.bf16 %v782, %v782
        %v884 = vunpack.c.l.b16 %v882
        %v885 = vpack.c.b16 %v884, %v884
        %886 = vrot.lane.b32.xlu0 %v885, 8
        %v887 = vpop.permute.xlu0 %886
        %vm889 = vcmask 126016
        %890 = vst.msk [vmem:[#allocation6] sm:$0xf] %vm889, %v887
        %v891 = vpack.c.bf16 %v828, %v828
        %v893 = vunpack.c.l.b16 %v891
        %v894 = vpack.c.b16 %v893, %v893
        %895 = vrot.lane.b32.xlu0 %v894, 16
        %v896 = vpop.permute.xlu0 %895
        %vm898 = vcmask 191616
        %899 = vst.msk [vmem:[#allocation6] sm:$0xf] %vm898, %v896
        %v900 = vpack.c.bf16 %v874, %v874
        %v902 = vunpack.c.l.b16 %v900
        %v903 = vpack.c.b16 %v902, %v902
        %904 = vrot.lane.b32.xlu0 %v903, 24
        %v905 = vpop.permute.xlu0 %904
        %vm907 = vcmask 257216
        %908 = vst.msk [vmem:[#allocation6] sm:$0xf] %vm907, %v905
        %v909 = vld [vmem:[#allocation6] sm:$0xf]
        %v910 = vld [vmem:[#allocation12] sm:$0xf]
        %v911 = vld [vmem:[#allocation12 + $0x4] sm:$0xf]
        %v912 = vld [vmem:[#allocation12 + $0x8] sm:$0xf]
        %v913 = vld [vmem:[#allocation12 + $0xc] sm:$0xf]
        %v918 = vunpack.c.l.b16 %v910
        %v919 = vunpack.c.l.b16 %v911
        %v920 = vunpack.c.l.b16 %v912
        %v921 = vunpack.c.l.b16 %v913
        %v922 = vpack.c.b16 %v919, %v918
        %v923 = vpack.c.b16 %v921, %v920
        %vm926 = vcmask 261120
        %v928 = vsel %vm926, %v909, 0
        %930 = vmatprep.subr.bf16.mxu0 0
        %931 = vmatpush1.bf16.msra.mxu0 %v922
        %932 = vmatprep.subr.bf16.mxu0 0
        %933 = vmatpush1.bf16.msra.mxu0 %v923
        %934 = vmatprep.subr.bf16.mxu0 0
        %935 = vmatpush1.bf16.msra.mxu0 0
        %936 = vmatprep.subr.bf16.mxu0 0
        %937 = vmatpush1.bf16.msra.mxu0 0
        %938 = vmatprep.subr.bf16.mxu0 0
        %939 = vmatpush1.bf16.msra.mxu0 0
        %940 = vmatprep.subr.bf16.mxu0 0
        %941 = vmatpush1.bf16.msra.mxu0 0
        %942 = vmatprep.subr.bf16.mxu0 0
        %943 = vmatpush1.bf16.msra.mxu0 0
        %944 = vmatprep.subr.bf16.mxu0 0
        %945 = vmatpush1.bf16.msra.mxu0 0
        %946 = vmatprep.subr.bf16.mxu0 0
        %947 = vmatpush1.bf16.msra.mxu0 0
        %948 = vmatprep.subr.bf16.mxu0 0
        %949 = vmatpush1.bf16.msra.mxu0 0
        %950 = vmatprep.subr.bf16.mxu0 0
        %951 = vmatpush1.bf16.msra.mxu0 0
        %952 = vmatprep.subr.bf16.mxu0 0
        %953 = vmatpush1.bf16.msra.mxu0 0
        %954 = vmatprep.subr.bf16.mxu0 0
        %955 = vmatpush1.bf16.msra.mxu0 0
        %956 = vmatprep.subr.bf16.mxu0 0
        %957 = vmatpush1.bf16.msra.mxu0 0
        %958 = vmatprep.subr.bf16.mxu0 0
        %959 = vmatpush1.bf16.msra.mxu0 0
        %960 = vmatprep.subr.bf16.mxu0 0
        %961 = vmatpush1.bf16.msra.mxu0 0
        %962 = vmatprep.mubr.bf16.mxu0 0
        %963 = vmatmul.mubr.bf16.gmra.mrb[0].mxu0 %v928
        %v964 = vpop.f32.mrb[0].mxu0
        %v965 = vadd.f32 0.0, %v964
        %v966 = vpop.f32.mrb[0].mxu0
        %v967 = vpop.f32.mrb[0].mxu0
        %v968 = vpop.f32.mrb[0].mxu0
        %969 = vdwg.mxu0
        %s970 = scalar_lea.vmem [#allocation2], %s440
        %v971 = vld [vmem:[%s970] sm:$0xff]
        %v972 = vadd.f32 %v971, %v965
        %973 = vst.msk [vmem:[%s282] sm:$0xff] %vm926, %v972
        %s974 = sand.u32 %s155, 1
        %s975 = scalar_lea.sflag [#allocation9], %s974
        %s976 = sand.u32 %s155, 1
        %s977 = smul.addr %s976, 8
        %s978 = scalar_lea.vmem [#allocation13], %s977
        // Predicated region
        $region57: #{tpu_custom_call.1} parent=39 // pred_check
          %p979 = pneg %p165
        $region58: #{tpu_custom_call.1} parent=39 // pred_check_branch
          %981 = sbr.rel (%p979) target = $region60
        $region59: #{tpu_custom_call.1} parent=39 // pred_region
          %s983 = ssub.s32 128, 128
          %984 = vsyncadd %s975, %s983
          %s985 = sadd.s32 %s28, %s27
          %s986 = smul.addr %s985, 128
          %s987 = scalar_lea.hbm %s5, %s986
          %s989 = sshll.u32 %s978, 4
          %s990 = int_to_ptr.vmem [resolvable:$true] %s989
          %992 = dma.vmem_to_hbm [thread:$0]  %s990, 128, %s987, %s975
        $region60: #{tpu_custom_call.1} parent=39 // pred_fallthru
          _
      $region40: #{tpu_custom_call.1} parent=5 // pred_fallthru
        _
      %p993 = scmp.le.s32.totalorder 2, %s18
      // Predicated region
      $region61: #{tpu_custom_call.1} parent=5 // pred_check
        %p994 = pneg %p993
      $region62: #{tpu_custom_call.1} parent=5 // pred_check_branch
        %996 = sbr.rel (%p994) target = $region64
      $region63: #{tpu_custom_call.1} parent=5 // pred_region
        %s997 = ssub.s32 %s18, 2
        // Predicated region
        $region65: #{tpu_custom_call.1} parent=63 // pred_check
          %p998 = pneg %p171
        $region66: #{tpu_custom_call.1} parent=63 // pred_check_branch
          %1000 = sbr.rel (%p998) target = $region68
        $region67: #{tpu_custom_call.1} parent=63 // pred_region
          %s1001 = sand.u32 %s156, 1
          %s1002 = scalar_lea.sflag [#allocation9], %s1001
          %s1003 = sand.u32 %s156, 1
          %s1004 = smul.addr %s1003, 8
          %s1005 = scalar_lea.vmem [#allocation13], %s1004
          %1006 = dma.done %s1002, 128
        $region68: #{tpu_custom_call.1} parent=63 // pred_fallthru
          _
      $region64: #{tpu_custom_call.1} parent=5 // pred_fallthru
        _
    $region6: #{tpu_custom_call.1} parent=1 // loop_footer
      %s22 = sadd.s32 1, %s18
    $region7: #{tpu_custom_call.1} parent=1 // loop_footer_branch
      %17 = sbr.rel target = $region3
    $region8: #{tpu_custom_call.1} parent=1 // loop_exit
      _
    %1007 = vsyncpa [#allocation8], 1
    %s1008 = scalar_lea.sflag [#allocation8], 1
    %1009 = vsyncpa %s1008, 1
    %1010 = vsyncpa [#allocation11], 1
    %1011 = vsyncpa [#allocation9], 1
    %s1012 = scalar_lea.sflag [#allocation9], 1
    %1013 = vsyncpa %s1012, 1

</llo_original>
